<compile_context>
chip_gen: v5e
topology: v5e:2x2
jax: 0.10.0
libtpu: 0.0.40
codegen_flags: <defaults>
</compile_context>

<pallas_src>
import functools

import jax
import jax.numpy as jnp
from jax import lax
from jax.experimental import pallas as pl
from jax.experimental.pallas import tpu as pltpu

BN_EPS = 1e-5


def _round_up(a, b):
    return (a + b - 1) // b * b


def _vmem_budget():
    """Generation-aware scoped-VMEM budget (bytes)."""
    try:
        cap = int(pltpu.get_tpu_info().vmem_capacity_bytes)
    except Exception:
        cap = 64 * 1024 * 1024          # conservative (v7x-sized) fallback
    # ~3/4 of physical VMEM: ~48 MiB on v7x (64 MiB/TC), ~96 MiB on v5e/v6e.
    return max(32 * 1024 * 1024, min(3 * cap // 4, 100 * 1024 * 1024))


# ==========================================================================
# Fused single-kernel path (whole problem resident in VMEM): one HBM sweep
# of g/x, one launch.  Used when the footprint fits comfortably in VMEM.
# ==========================================================================
def _fused_kernel(g_ref, x_ref, wg_ref, wx_ref, wp_ref,
                  bng_ref, bnx_ref, bnp_ref, o_ref,
                  yg_s, yx_s, p_s, *, n_batch, m_count):
    f_int = wg_ref.shape[0]
    inv_m = 1.0 / m_count

    # ---- 1x1 convs + per-channel batch statistics (conv bias cancels under
    #      batch-stat BN, so it is dropped exactly). ----
    sg = jnp.zeros((f_int, 1), jnp.float32)
    qg = jnp.zeros((f_int, 1), jnp.float32)
    sx = jnp.zeros((f_int, 1), jnp.float32)
    qx = jnp.zeros((f_int, 1), jnp.float32)
    for i in range(n_batch):
        yg = jnp.dot(wg_ref[...], g_ref[i], preferred_element_type=jnp.float32)
        yx = jnp.dot(wx_ref[...], x_ref[i], preferred_element_type=jnp.float32)
        yg_s[i] = yg
        yx_s[i] = yx
        sg = sg + jnp.sum(yg, axis=1, keepdims=True)
        qg = qg + jnp.sum(yg * yg, axis=1, keepdims=True)
        sx = sx + jnp.sum(yx, axis=1, keepdims=True)
        qx = qx + jnp.sum(yx * yx, axis=1, keepdims=True)

    # ---- fold training-mode BN into per-channel scale/shift ----
    mg = sg * inv_m
    vg = jnp.maximum(qg * inv_m - mg * mg, 0.0)
    scale_g = bng_ref[:, 0:1] * lax.rsqrt(vg + BN_EPS)
    shift_g = bng_ref[:, 1:2] - mg * scale_g
    mx = sx * inv_m
    vx = jnp.maximum(qx * inv_m - mx * mx, 0.0)
    scale_x = bnx_ref[:, 0:1] * lax.rsqrt(vx + BN_EPS)
    shift_x = bnx_ref[:, 1:2] - mx * scale_x
    cshift = shift_g + shift_x

    # ---- psi logits + their batch statistics ----
    sp = jnp.zeros((1, 1), jnp.float32)
    qp = jnp.zeros((1, 1), jnp.float32)
    for i in range(n_batch):
        h = jnp.maximum(scale_g * yg_s[i] + scale_x * yx_s[i] + cshift, 0.0)
        p = jnp.sum(wp_ref[...] * h, axis=0, keepdims=True)        # (1, HW)
        p_s[i] = p
        sp = sp + jnp.sum(p, keepdims=True)
        qp = qp + jnp.sum(p * p, keepdims=True)

    mp = sp * inv_m
    vp = jnp.maximum(qp * inv_m - mp * mp, 0.0)
    scale_p = bnp_ref[:, 0:1] * lax.rsqrt(vp + BN_EPS)
    shift_p = bnp_ref[:, 1:2] - mp * scale_p

    # ---- gated output ----
    for i in range(n_batch):
        psi = jax.nn.sigmoid(p_s[i] * scale_p + shift_p)            # (1, HW)
        o_ref[i] = (x_ref[i] * psi).astype(o_ref.dtype)


# ==========================================================================
# Tiled three-pass path (streams g/x from HBM, BlockSpec auto-pipelined).
# ==========================================================================
def _stats_kernel(g_ref, x_ref, wg_ref, wx_ref,
                  sg_ref, qg_ref, sx_ref, qx_ref, *, hw, thw, needs_mask):
    t = pl.program_id(1)

    @pl.when(t == 0)
    def _init():
        sg_ref[...] = jnp.zeros_like(sg_ref)
        qg_ref[...] = jnp.zeros_like(qg_ref)
        sx_ref[...] = jnp.zeros_like(sx_ref)
        qx_ref[...] = jnp.zeros_like(qx_ref)

    # 1x1 conv == (F_int, C) @ (C, thw): lane-dense MXU output.
    yg = jnp.dot(wg_ref[...], g_ref[...], preferred_element_type=jnp.float32)
    yx = jnp.dot(wx_ref[...], x_ref[...], preferred_element_type=jnp.float32)

    def acc(ygv, yxv):
        sg_ref[...] += jnp.sum(ygv, axis=1, keepdims=True)
        qg_ref[...] += jnp.sum(ygv * ygv, axis=1, keepdims=True)
        sx_ref[...] += jnp.sum(yxv, axis=1, keepdims=True)
        qx_ref[...] += jnp.sum(yxv * yxv, axis=1, keepdims=True)

    if needs_mask:
        last = pl.num_programs(1) - 1

        @pl.when(t < last)
        def _full():
            acc(yg, yx)

        @pl.when(t == last)
        def _tail():
            # Partial tail block: OOB lanes hold undefined data -> mask them.
            col = t * thw + lax.broadcasted_iota(jnp.int32, (1, thw), 1)
            m = col < hw
            acc(jnp.where(m, yg, 0.0), jnp.where(m, yx, 0.0))
    else:
        acc(yg, yx)


def _psi_kernel(g_ref, x_ref, wg_ref, wx_ref, c_ref, wp_ref,
                p_ref, sp_ref, qp_ref, *, hw, thw, needs_mask, use_mxu_psi):
    t = pl.program_id(1)

    @pl.when(t == 0)
    def _init():
        sp_ref[...] = jnp.zeros_like(sp_ref)
        qp_ref[...] = jnp.zeros_like(qp_ref)

    h = jnp.dot(wg_ref[...], g_ref[...], preferred_element_type=jnp.float32)
    h = h + jnp.dot(wx_ref[...], x_ref[...], preferred_element_type=jnp.float32)
    h = jnp.maximum(h + c_ref[...], 0.0)                   # relu(BN_g + BN_x)

    if use_mxu_psi:
        # F_int large: contract on the MXU (wp is (1, F_int)).
        p = jnp.dot(wp_ref[...], h, preferred_element_type=jnp.float32)
    else:
        # F_int small: VPU multiply + sublane(XLU) reduce keeps (1, thw) dense.
        p = jnp.sum(wp_ref[...] * h, axis=0, keepdims=True)
    p_ref[...] = p

    def acc(pv):
        sp_ref[...] += jnp.sum(pv, axis=1, keepdims=True)
        qp_ref[...] += jnp.sum(pv * pv, axis=1, keepdims=True)

    if needs_mask:
        last = pl.num_programs(1) - 1

        @pl.when(t < last)
        def _full():
            acc(p)

        @pl.when(t == last)
        def _tail():
            col = t * thw + lax.broadcasted_iota(jnp.int32, (1, thw), 1)
            acc(jnp.where(col < hw, p, 0.0))
    else:
        acc(p)


def _apply_kernel(x_ref, p_ref, ab_ref, o_ref):
    scale = ab_ref[0, 0]
    shift = ab_ref[0, 1]
    psi = jax.nn.sigmoid(p_ref[...] * scale + shift)       # (1, thw), lane dense
    o_ref[...] = (x_ref[...].astype(jnp.float32) * psi).astype(o_ref.dtype)


def _fold_bn(s, ssq, count, gamma, beta):
    """Fold training-mode BN (batch stats from sum/sumsq) into scale/shift."""
    mean = s / count
    var = jnp.maximum(ssq / count - mean * mean, 0.0)
    scale = gamma * lax.rsqrt(var + BN_EPS)
    shift = beta - mean * scale
    return scale, shift


# ==========================================================================
# Wrapper
# ==========================================================================
def attention_block(g, x, params, *, tile=None, force_tiled=False):
    """g: (N, F_g, H, W), x: (N, F_l, H, W) NCHW."""
    (wg, bg, gam_g, bet_g,
     wx, bx, gam_x, bet_x,
     wp, bp, gam_p, bet_p) = params
    # NOTE: conv biases bg/bx/bp are never used -- a per-channel bias cancels
    # exactly under training-mode BatchNorm (batch-mean subtraction).

    N, Cg, H, W = g.shape
    Cl = x.shape[1]
    F_int = wg.shape[0]
    HW = H * W
    M = N * HW                                   # BatchNorm statistics count
    budget = _vmem_budget()

    # Channel-major slabs: pure reshape of NCHW (no transpose); spatial on lanes.
    g3 = g.reshape(N, Cg, HW).astype(jnp.float32)
    x3 = x.reshape(N, Cl, HW)
    x3f = x3.astype(jnp.float32)
    wg32 = wg.astype(jnp.float32)
    wx32 = wx.astype(jnp.float32)

    # ---- fused single-kernel fallback for small/medium problems -----------
    p8 = lambda a: _round_up(a, 8)
    hw128 = _round_up(HW, 128)
    fused_bytes = 4 * N * hw128 * (p8(Cg) + 2 * p8(Cl) + 2 * p8(F_int) + 8)
    if (not force_tiled) and fused_bytes <= budget // 2:
        bng = jnp.stack([gam_g, bet_g], axis=1).astype(jnp.float32)   # (F_int, 2)
        bnx = jnp.stack([gam_x, bet_x], axis=1).astype(jnp.float32)
        bnp = jnp.stack([gam_p, bet_p], axis=1).astype(jnp.float32)   # (1, 2)
        wp_col = wp.reshape(F_int, 1).astype(jnp.float32)
        out3 = pl.pallas_call(
            functools.partial(_fused_kernel, n_batch=N, m_count=float(M)),
            out_shape=jax.ShapeDtypeStruct((N, Cl, HW), x.dtype),
            scratch_shapes=[pltpu.VMEM((N, F_int, HW), jnp.float32),
                            pltpu.VMEM((N, F_int, HW), jnp.float32),
                            pltpu.VMEM((N, 1, HW), jnp.float32)],
            compiler_params=pltpu.CompilerParams(vmem_limit_bytes=budget),
        )(g3, x3f, wg32, wx32, wp_col, bng, bnx, bnp)
        return out3.reshape(N, Cl, H, W)

    # ---- adaptive lane tile (multiple of 128); no HBM padding -------------
    if tile is not None:
        thw = max(128, _round_up(tile, 128))
    else:
        per_lane = 8 * max(Cg + Cl + 1, 2 * Cl + 1)   # f32, double-buffered
        cap = max(512, (budget // 3) // per_lane // 128 * 128)
        thw = min(_round_up(HW, 128), cap, 16384)
    nt = pl.cdiv(HW, thw)
    grid = (N, nt)
    needs_mask = (HW % thw) != 0

    gx_specs = [
        pl.BlockSpec((None, Cg, thw), lambda n, t: (n, 0, t)),
        pl.BlockSpec((None, Cl, thw), lambda n, t: (n, 0, t)),
    ]

    def w_spec(shape):
        return pl.BlockSpec(shape, lambda n, t: (0, 0))

    acc_params = pltpu.CompilerParams(
        dimension_semantics=("parallel", "arbitrary"),   # batch on both TCs (v7x)
        vmem_limit_bytes=budget)

    # ---- pass 1: per-batch branch statistics ------------------------------
    col = jax.ShapeDtypeStruct((N, F_int, 1), jnp.float32)
    stat_spec = pl.BlockSpec((None, F_int, 1), lambda n, t: (n, 0, 0))
    sg, qg, sx, qx = pl.pallas_call(
        functools.partial(_stats_kernel, hw=HW, thw=thw, needs_mask=needs_mask),
        out_shape=(col, col, col, col),
        grid=grid,
        in_specs=gx_specs + [w_spec((F_int, Cg)), w_spec((F_int, Cl))],
        out_specs=(stat_spec, stat_spec, stat_spec, stat_spec),
        compiler_params=acc_params,
    )(g3, x3f, wg32, wx32)

    # ---- fold BN into per-channel scale/shift, folded into the weights ----
    scale_g, shift_g = _fold_bn(jnp.sum(sg, axis=0)[:, 0],
                                jnp.sum(qg, axis=0)[:, 0], M, gam_g, bet_g)
    scale_x, shift_x = _fold_bn(jnp.sum(sx, axis=0)[:, 0],
                                jnp.sum(qx, axis=0)[:, 0], M, gam_x, bet_x)
    wg_f = (wg32 * scale_g[:, None]).astype(jnp.float32)
    wx_f = (wx32 * scale_x[:, None]).astype(jnp.float32)
    cc = (shift_g + shift_x).reshape(F_int, 1).astype(jnp.float32)

    use_mxu_psi = F_int >= 128
    wp_arr = (wp.reshape(1, F_int) if use_mxu_psi
              else wp.reshape(F_int, 1)).astype(jnp.float32)
    wp_spec = w_spec((1, F_int)) if use_mxu_psi else w_spec((F_int, 1))

    # ---- pass 2: psi logits + per-batch psi statistics --------------------
    one = jax.ShapeDtypeStruct((N, 1, 1), jnp.float32)
    one_spec = pl.BlockSpec((None, 1, 1), lambda n, t: (n, 0, 0))
    praw, sp, qp = pl.pallas_call(
        functools.partial(_psi_kernel, hw=HW, thw=thw,
                          needs_mask=needs_mask, use_mxu_psi=use_mxu_psi),
        out_shape=(jax.ShapeDtypeStruct((N, 1, HW), jnp.float32), one, one),
        grid=grid,
        in_specs=gx_specs + [w_spec((F_int, Cg)), w_spec((F_int, Cl)),
                             w_spec((F_int, 1)), wp_spec],
        out_specs=(pl.BlockSpec((None, 1, thw), lambda n, t: (n, 0, t)),
                   one_spec, one_spec),
        compiler_params=acc_params,
    )(g3, x3f, wg_f, wx_f, cc, wp_arr)

    mean_p = jnp.sum(sp) / M
    var_p = jnp.maximum(jnp.sum(qp) / M - mean_p * mean_p, 0.0)
    scale_p = gam_p[0] * lax.rsqrt(var_p + BN_EPS)
    shift_p = bet_p[0] - mean_p * scale_p
    ab = jnp.stack([scale_p, shift_p]).reshape(1, 2).astype(jnp.float32)

    # ---- pass 3: gated output (parallel over both grid axes) --------------
    out3 = pl.pallas_call(
        _apply_kernel,
        out_shape=jax.ShapeDtypeStruct((N, Cl, HW), x.dtype),
        grid=grid,
        in_specs=[
            pl.BlockSpec((None, Cl, thw), lambda n, t: (n, 0, t)),
            pl.BlockSpec((None, 1, thw), lambda n, t: (n, 0, t)),
            pl.BlockSpec((1, 2), lambda n, t: (0, 0),
                         memory_space=pltpu.MemorySpace.SMEM),
        ],
        out_specs=pl.BlockSpec((None, Cl, thw), lambda n, t: (n, 0, t)),
        compiler_params=pltpu.CompilerParams(
            dimension_semantics=("parallel", "parallel"),
            vmem_limit_bytes=budget),
    )(x3, praw, ab)

    return out3.reshape(N, Cl, H, W)


# --------------------------------------------------------------------------
# Synthetic parameters (PyTorch-native shapes) and pure-JAX reference.
# --------------------------------------------------------------------------
def make_params(key, F_g, F_l, F_int):
    ks = jax.random.split(key, 9)

    def conv(k, cout, cin):
        kw, kb = jax.random.split(k)
        return (0.1 * jax.random.normal(kw, (cout, cin), jnp.float32),
                0.1 * jax.random.normal(kb, (cout,), jnp.float32))

    def bn(kg, kb, c):
        return (1.0 + 0.1 * jax.random.normal(kg, (c,), jnp.float32),
                0.1 * jax.random.normal(kb, (c,), jnp.float32))

    wg, bg = conv(ks[0], F_int, F_g)
    gam_g, bet_g = bn(ks[1], ks[2], F_int)
    wx, bx = conv(ks[3], F_int, F_l)
    gam_x, bet_x = bn(ks[4], ks[5], F_int)
    wp, bp = conv(ks[6], 1, F_int)
    gam_p, bet_p = bn(ks[7], ks[8], 1)
    return (wg, bg, gam_g, bet_g, wx, bx, gam_x, bet_x, wp, bp, gam_p, bet_p)


def attention_block_ref(g, x, params):
    """Faithful PyTorch math (with conv biases, explicit train-mode BN)."""
    (wg, bg, gam_g, bet_g, wx, bx, gam_x, bet_x, wp, bp, gam_p, bet_p) = params
    N, Cg, H, W = g.shape
    Cl = x.shape[1]
    M = N * H * W
    hp = lax.Precision.HIGHEST

    def to2d(a):
        return jnp.transpose(a, (0, 2, 3, 1)).reshape(M, a.shape[1])

    def bn_train(y, gamma, beta):
        mean = jnp.mean(y, axis=0, keepdims=True)
        var = jnp.mean((y - mean) ** 2, axis=0, keepdims=True)
        return (y - mean) / jnp.sqrt(var + BN_EPS) * gamma + beta

    g2, x2 = to2d(g), to2d(x)
    g1 = bn_train(jnp.dot(g2, wg.T, precision=hp) + bg, gam_g, bet_g)
    x1 = bn_train(jnp.dot(x2, wx.T, precision=hp) + bx, gam_x, bet_x)
    h = jnp.maximum(g1 + x1, 0.0)
    p = jax.nn.sigmoid(bn_train(jnp.dot(h, wp.T, precision=hp) + bp, gam_p, bet_p))
    out2 = x2 * p
    return out2.reshape(N, H, W, Cl).transpose(0, 3, 1, 2)


if __name__ == "__main__":
    key = jax.random.PRNGKey(0)
    k_g, k_x, k_p, k_g2, k_x2, k_p2 = jax.random.split(key, 6)

    # ---- test 1: small shape -> fused single-kernel path ------------------
    N, F_g, F_l, F_int, H, W = 2, 4, 4, 8, 16, 16
    g = jax.random.normal(k_g, (N, F_g, H, W), jnp.float32)
    x = jax.random.normal(k_x, (N, F_l, H, W), jnp.float32)
    params = make_params(k_p, F_g, F_l, F_int)

    out = jax.block_until_ready(jax.jit(attention_block)(g, x, params))
    ref = attention_block_ref(g, x, params)
    assert out.shape == (N, F_l, H, W)
    err = float(jnp.max(jnp.abs(out - ref)))
    assert jnp.allclose(out, ref, atol=5e-5, rtol=5e-5), f"fused mismatch: {err}"

    # ---- test 2: tiled streaming path with a ragged HW tail ---------------
    N2, F_g2, F_l2, F_int2, H2, W2 = 2, 4, 6, 8, 9, 21      # HW = 189 (not %128)
    g2 = jax.random.normal(k_g2, (N2, F_g2, H2, W2), jnp.float32)
    x2 = jax.random.normal(k_x2, (N2, F_l2, H2, W2), jnp.float32)
    params2 = make_params(k_p2, F_g2, F_l2, F_int2)

    tiled_fn = jax.jit(functools.partial(attention_block, tile=128, force_tiled=True))
    out2 = jax.block_until_ready(tiled_fn(g2, x2, params2))
    ref2 = attention_block_ref(g2, x2, params2)
    assert out2.shape == (N2, F_l2, H2, W2)
    err2 = float(jnp.max(jnp.abs(out2 - ref2)))
    assert jnp.allclose(out2, ref2, atol=1e-4, rtol=1e-4), f"tiled mismatch: {err2}"

    print("KERNEL_OK")
</pallas_src>

<mosaic_0001>
module attributes {stable_mosaic.version = 11 : i64} {
  func.func @_fused_kernel(%arg0: memref<2x4x256xf32, #tpu.memory_space<vmem>>, %arg1: memref<2x4x256xf32, #tpu.memory_space<vmem>>, %arg2: memref<8x4xf32, #tpu.memory_space<vmem>>, %arg3: memref<8x4xf32, #tpu.memory_space<vmem>>, %arg4: memref<8x1xf32, #tpu.memory_space<vmem>>, %arg5: memref<8x2xf32, #tpu.memory_space<vmem>>, %arg6: memref<8x2xf32, #tpu.memory_space<vmem>>, %arg7: memref<1x2xf32, #tpu.memory_space<vmem>>, %arg8: memref<2x4x256xf32, #tpu.memory_space<vmem>>, %arg9: memref<2x8x256xf32, #tpu.memory_space<vmem>>, %arg10: memref<2x8x256xf32, #tpu.memory_space<vmem>>, %arg11: memref<2x1x256xf32, #tpu.memory_space<vmem>>) attributes {dimension_semantics = [], scalar_prefetch = 0 : i64, scratch_operands = 3 : i64, tpu.core_type = #tpu.core_type<tc>} {
    %cst = arith.constant 0.000000e+00 : f32
    %0 = vector.broadcast %cst : f32 to vector<8x1xf32>
    %cst_0 = arith.constant 0.000000e+00 : f32
    %1 = vector.broadcast %cst_0 : f32 to vector<8x1xf32>
    %cst_1 = arith.constant 0.000000e+00 : f32
    %2 = vector.broadcast %cst_1 : f32 to vector<8x1xf32>
    %cst_2 = arith.constant 0.000000e+00 : f32
    %3 = vector.broadcast %cst_2 : f32 to vector<8x1xf32>
    %c0 = arith.constant 0 : index
    %c0_3 = arith.constant 0 : index
    %4 = vector.load %arg2[%c0, %c0_3] : memref<8x4xf32, #tpu.memory_space<vmem>>, vector<8x4xf32>
    %c0_4 = arith.constant 0 : index
    %c0_5 = arith.constant 0 : index
    %c0_6 = arith.constant 0 : index
    %5 = vector.load %arg0[%c0_4, %c0_5, %c0_6] : memref<2x4x256xf32, #tpu.memory_space<vmem>>, vector<1x4x256xf32>
    %6 = vector.shape_cast %5 : vector<1x4x256xf32> to vector<4x256xf32>
    %cst_7 = arith.constant dense<0.000000e+00> : vector<8x256xf32>
    %7 = tpu.matmul %4, %6, %cst_7 {dimension_numbers = #tpu.dot_dimension_numbers<[1], [0], [0], [1], [0, 0, 1, 1], [], []>} : vector<8x4xf32>, vector<4x256xf32>, vector<8x256xf32> -> vector<8x256xf32>
    %c0_8 = arith.constant 0 : index
    %c0_9 = arith.constant 0 : index
    %8 = vector.load %arg3[%c0_8, %c0_9] : memref<8x4xf32, #tpu.memory_space<vmem>>, vector<8x4xf32>
    %c0_10 = arith.constant 0 : index
    %c0_11 = arith.constant 0 : index
    %c0_12 = arith.constant 0 : index
    %9 = vector.load %arg1[%c0_10, %c0_11, %c0_12] : memref<2x4x256xf32, #tpu.memory_space<vmem>>, vector<1x4x256xf32>
    %10 = vector.shape_cast %9 : vector<1x4x256xf32> to vector<4x256xf32>
    %cst_13 = arith.constant dense<0.000000e+00> : vector<8x256xf32>
    %11 = tpu.matmul %8, %10, %cst_13 {dimension_numbers = #tpu.dot_dimension_numbers<[1], [0], [0], [1], [0, 0, 1, 1], [], []>} : vector<8x4xf32>, vector<4x256xf32>, vector<8x256xf32> -> vector<8x256xf32>
    %c0_14 = arith.constant 0 : index
    %c0_15 = arith.constant 0 : index
    %c0_16 = arith.constant 0 : index
    %12 = vector.load %arg9[%c0_14, %c0_15, %c0_16] : memref<2x8x256xf32, #tpu.memory_space<vmem>>, vector<1x8x256xf32>
    %13 = vector.shape_cast %12 : vector<1x8x256xf32> to vector<8x256xf32>
    %14 = vector.shape_cast %7 : vector<8x256xf32> to vector<1x8x256xf32>
    tpu.vector_store %arg9[%c0_14, %c0_15, %c0_16], %14 {strides = array<i32>} : memref<2x8x256xf32, #tpu.memory_space<vmem>>, vector<1x8x256xf32>,
    %c0_17 = arith.constant 0 : index
    %c0_18 = arith.constant 0 : index
    %c0_19 = arith.constant 0 : index
    %15 = vector.load %arg10[%c0_17, %c0_18, %c0_19] : memref<2x8x256xf32, #tpu.memory_space<vmem>>, vector<1x8x256xf32>
    %16 = vector.shape_cast %15 : vector<1x8x256xf32> to vector<8x256xf32>
    %17 = vector.shape_cast %11 : vector<8x256xf32> to vector<1x8x256xf32>
    tpu.vector_store %arg10[%c0_17, %c0_18, %c0_19], %17 {strides = array<i32>} : memref<2x8x256xf32, #tpu.memory_space<vmem>>, vector<1x8x256xf32>,
    %cst_20 = arith.constant dense<0.000000e+00> : vector<8xf32>
    %18 = vector.multi_reduction <add>, %7, %cst_20 [1] : vector<8x256xf32> to vector<8xf32>
    %19 = vector.shape_cast %18 : vector<8xf32> to vector<8x1xf32>
    %20 = arith.addf %0, %19 : vector<8x1xf32>
    %21 = arith.mulf %7, %7 : vector<8x256xf32>
    %cst_21 = arith.constant dense<0.000000e+00> : vector<8xf32>
    %22 = vector.multi_reduction <add>, %21, %cst_21 [1] : vector<8x256xf32> to vector<8xf32>
    %23 = vector.shape_cast %22 : vector<8xf32> to vector<8x1xf32>
    %24 = arith.addf %1, %23 : vector<8x1xf32>
    %cst_22 = arith.constant dense<0.000000e+00> : vector<8xf32>
    %25 = vector.multi_reduction <add>, %11, %cst_22 [1] : vector<8x256xf32> to vector<8xf32>
    %26 = vector.shape_cast %25 : vector<8xf32> to vector<8x1xf32>
    %27 = arith.addf %2, %26 : vector<8x1xf32>
    %28 = arith.mulf %11, %11 : vector<8x256xf32>
    %cst_23 = arith.constant dense<0.000000e+00> : vector<8xf32>
    %29 = vector.multi_reduction <add>, %28, %cst_23 [1] : vector<8x256xf32> to vector<8xf32>
    %30 = vector.shape_cast %29 : vector<8xf32> to vector<8x1xf32>
    %31 = arith.addf %3, %30 : vector<8x1xf32>
    %c0_24 = arith.constant 0 : index
    %c0_25 = arith.constant 0 : index
    %32 = vector.load %arg2[%c0_24, %c0_25] : memref<8x4xf32, #tpu.memory_space<vmem>>, vector<8x4xf32>
    %c1 = arith.constant 1 : index
    %c0_26 = arith.constant 0 : index
    %c0_27 = arith.constant 0 : index
    %33 = vector.load %arg0[%c1, %c0_26, %c0_27] : memref<2x4x256xf32, #tpu.memory_space<vmem>>, vector<1x4x256xf32>
    %34 = vector.shape_cast %33 : vector<1x4x256xf32> to vector<4x256xf32>
    %cst_28 = arith.constant dense<0.000000e+00> : vector<8x256xf32>
    %35 = tpu.matmul %32, %34, %cst_28 {dimension_numbers = #tpu.dot_dimension_numbers<[1], [0], [0], [1], [0, 0, 1, 1], [], []>} : vector<8x4xf32>, vector<4x256xf32>, vector<8x256xf32> -> vector<8x256xf32>
    %c0_29 = arith.constant 0 : index
    %c0_30 = arith.constant 0 : index
    %36 = vector.load %arg3[%c0_29, %c0_30] : memref<8x4xf32, #tpu.memory_space<vmem>>, vector<8x4xf32>
    %c1_31 = arith.constant 1 : index
    %c0_32 = arith.constant 0 : index
    %c0_33 = arith.constant 0 : index
    %37 = vector.load %arg1[%c1_31, %c0_32, %c0_33] : memref<2x4x256xf32, #tpu.memory_space<vmem>>, vector<1x4x256xf32>
    %38 = vector.shape_cast %37 : vector<1x4x256xf32> to vector<4x256xf32>
    %cst_34 = arith.constant dense<0.000000e+00> : vector<8x256xf32>
    %39 = tpu.matmul %36, %38, %cst_34 {dimension_numbers = #tpu.dot_dimension_numbers<[1], [0], [0], [1], [0, 0, 1, 1], [], []>} : vector<8x4xf32>, vector<4x256xf32>, vector<8x256xf32> -> vector<8x256xf32>
    %c1_35 = arith.constant 1 : index
    %c0_36 = arith.constant 0 : index
    %c0_37 = arith.constant 0 : index
    %40 = vector.load %arg9[%c1_35, %c0_36, %c0_37] : memref<2x8x256xf32, #tpu.memory_space<vmem>>, vector<1x8x256xf32>
    %41 = vector.shape_cast %40 : vector<1x8x256xf32> to vector<8x256xf32>
    %42 = vector.shape_cast %35 : vector<8x256xf32> to vector<1x8x256xf32>
    tpu.vector_store %arg9[%c1_35, %c0_36, %c0_37], %42 {strides = array<i32>} : memref<2x8x256xf32, #tpu.memory_space<vmem>>, vector<1x8x256xf32>,
    %c1_38 = arith.constant 1 : index
    %c0_39 = arith.constant 0 : index
    %c0_40 = arith.constant 0 : index
    %43 = vector.load %arg10[%c1_38, %c0_39, %c0_40] : memref<2x8x256xf32, #tpu.memory_space<vmem>>, vector<1x8x256xf32>
    %44 = vector.shape_cast %43 : vector<1x8x256xf32> to vector<8x256xf32>
    %45 = vector.shape_cast %39 : vector<8x256xf32> to vector<1x8x256xf32>
    tpu.vector_store %arg10[%c1_38, %c0_39, %c0_40], %45 {strides = array<i32>} : memref<2x8x256xf32, #tpu.memory_space<vmem>>, vector<1x8x256xf32>,
    %cst_41 = arith.constant dense<0.000000e+00> : vector<8xf32>
    %46 = vector.multi_reduction <add>, %35, %cst_41 [1] : vector<8x256xf32> to vector<8xf32>
    %47 = vector.shape_cast %46 : vector<8xf32> to vector<8x1xf32>
    %48 = arith.addf %20, %47 : vector<8x1xf32>
    %49 = arith.mulf %35, %35 : vector<8x256xf32>
    %cst_42 = arith.constant dense<0.000000e+00> : vector<8xf32>
    %50 = vector.multi_reduction <add>, %49, %cst_42 [1] : vector<8x256xf32> to vector<8xf32>
    %51 = vector.shape_cast %50 : vector<8xf32> to vector<8x1xf32>
    %52 = arith.addf %24, %51 : vector<8x1xf32>
    %cst_43 = arith.constant dense<0.000000e+00> : vector<8xf32>
    %53 = vector.multi_reduction <add>, %39, %cst_43 [1] : vector<8x256xf32> to vector<8xf32>
    %54 = vector.shape_cast %53 : vector<8xf32> to vector<8x1xf32>
    %55 = arith.addf %27, %54 : vector<8x1xf32>
    %56 = arith.mulf %39, %39 : vector<8x256xf32>
    %cst_44 = arith.constant dense<0.000000e+00> : vector<8xf32>
    %57 = vector.multi_reduction <add>, %56, %cst_44 [1] : vector<8x256xf32> to vector<8xf32>
    %58 = vector.shape_cast %57 : vector<8xf32> to vector<8x1xf32>
    %59 = arith.addf %31, %58 : vector<8x1xf32>
    %cst_45 = arith.constant 0.001953125 : f32
    %60 = vector.broadcast %cst_45 : f32 to vector<8x1xf32>
    %61 = arith.mulf %48, %60 : vector<8x1xf32>
    %cst_46 = arith.constant 0.001953125 : f32
    %62 = vector.broadcast %cst_46 : f32 to vector<8x1xf32>
    %63 = arith.mulf %52, %62 : vector<8x1xf32>
    %64 = arith.mulf %61, %61 : vector<8x1xf32>
    %65 = arith.subf %63, %64 : vector<8x1xf32>
    %cst_47 = arith.constant 0.000000e+00 : f32
    %66 = vector.broadcast %cst_47 : f32 to vector<8x1xf32>
    %67 = arith.maximumf %65, %66 : vector<8x1xf32>
    %c0_48 = arith.constant 0 : index
    %c0_49 = arith.constant 0 : index
    %68 = vector.load %arg5[%c0_48, %c0_49] : memref<8x2xf32, #tpu.memory_space<vmem>>, vector<8x1xf32>
    %cst_50 = arith.constant 9.99999974E-6 : f32
    %69 = vector.broadcast %cst_50 : f32 to vector<8x1xf32>
    %70 = arith.addf %67, %69 : vector<8x1xf32>
    %71 = math.rsqrt %70 : vector<8x1xf32>
    %72 = arith.mulf %68, %71 : vector<8x1xf32>
    %c0_51 = arith.constant 0 : index
    %c1_52 = arith.constant 1 : index
    %73 = vector.load %arg5[%c0_51, %c1_52] : memref<8x2xf32, #tpu.memory_space<vmem>>, vector<8x1xf32>
    %74 = arith.mulf %61, %72 : vector<8x1xf32>
    %75 = arith.subf %73, %74 : vector<8x1xf32>
    %cst_53 = arith.constant 0.001953125 : f32
    %76 = vector.broadcast %cst_53 : f32 to vector<8x1xf32>
    %77 = arith.mulf %55, %76 : vector<8x1xf32>
    %cst_54 = arith.constant 0.001953125 : f32
    %78 = vector.broadcast %cst_54 : f32 to vector<8x1xf32>
    %79 = arith.mulf %59, %78 : vector<8x1xf32>
    %80 = arith.mulf %77, %77 : vector<8x1xf32>
    %81 = arith.subf %79, %80 : vector<8x1xf32>
    %cst_55 = arith.constant 0.000000e+00 : f32
    %82 = vector.broadcast %cst_55 : f32 to vector<8x1xf32>
    %83 = arith.maximumf %81, %82 : vector<8x1xf32>
    %c0_56 = arith.constant 0 : index
    %c0_57 = arith.constant 0 : index
    %84 = vector.load %arg6[%c0_56, %c0_57] : memref<8x2xf32, #tpu.memory_space<vmem>>, vector<8x1xf32>
    %cst_58 = arith.constant 9.99999974E-6 : f32
    %85 = vector.broadcast %cst_58 : f32 to vector<8x1xf32>
    %86 = arith.addf %83, %85 : vector<8x1xf32>
    %87 = math.rsqrt %86 : vector<8x1xf32>
    %88 = arith.mulf %84, %87 : vector<8x1xf32>
    %c0_59 = arith.constant 0 : index
    %c1_60 = arith.constant 1 : index
    %89 = vector.load %arg6[%c0_59, %c1_60] : memref<8x2xf32, #tpu.memory_space<vmem>>, vector<8x1xf32>
    %90 = arith.mulf %77, %88 : vector<8x1xf32>
    %91 = arith.subf %89, %90 : vector<8x1xf32>
    %92 = arith.addf %75, %91 : vector<8x1xf32>
    %cst_61 = arith.constant 0.000000e+00 : f32
    %93 = vector.broadcast %cst_61 : f32 to vector<1x1xf32>
    %cst_62 = arith.constant 0.000000e+00 : f32
    %94 = vector.broadcast %cst_62 : f32 to vector<1x1xf32>
    %c0_63 = arith.constant 0 : index
    %c0_64 = arith.constant 0 : index
    %c0_65 = arith.constant 0 : index
    %95 = vector.load %arg9[%c0_63, %c0_64, %c0_65] : memref<2x8x256xf32, #tpu.memory_space<vmem>>, vector<1x8x256xf32>
    %96 = vector.shape_cast %95 : vector<1x8x256xf32> to vector<8x256xf32>
    %97 = vector.broadcast %72 : vector<8x1xf32> to vector<8x256xf32>
    %98 = arith.mulf %97, %96 : vector<8x256xf32>
    %c0_66 = arith.constant 0 : index
    %c0_67 = arith.constant 0 : index
    %c0_68 = arith.constant 0 : index
    %99 = vector.load %arg10[%c0_66, %c0_67, %c0_68] : memref<2x8x256xf32, #tpu.memory_space<vmem>>, vector<1x8x256xf32>
    %100 = vector.shape_cast %99 : vector<1x8x256xf32> to vector<8x256xf32>
    %101 = vector.broadcast %88 : vector<8x1xf32> to vector<8x256xf32>
    %102 = arith.mulf %101, %100 : vector<8x256xf32>
    %103 = arith.addf %98, %102 : vector<8x256xf32>
    %104 = vector.broadcast %92 : vector<8x1xf32> to vector<8x256xf32>
    %105 = arith.addf %103, %104 : vector<8x256xf32>
    %cst_69 = arith.constant 0.000000e+00 : f32
    %106 = vector.broadcast %cst_69 : f32 to vector<8x256xf32>
    %107 = arith.maximumf %105, %106 : vector<8x256xf32>
    %c0_70 = arith.constant 0 : index
    %c0_71 = arith.constant 0 : index
    %108 = vector.load %arg4[%c0_70, %c0_71] : memref<8x1xf32, #tpu.memory_space<vmem>>, vector<8x1xf32>
    %109 = vector.broadcast %108 : vector<8x1xf32> to vector<8x256xf32>
    %110 = arith.mulf %109, %107 : vector<8x256xf32>
    %cst_72 = arith.constant dense<0.000000e+00> : vector<256xf32>
    %111 = vector.multi_reduction <add>, %110, %cst_72 [0] : vector<8x256xf32> to vector<256xf32>
    %112 = vector.shape_cast %111 : vector<256xf32> to vector<1x256xf32>
    %c0_73 = arith.constant 0 : index
    %c0_74 = arith.constant 0 : index
    %c0_75 = arith.constant 0 : index
    %113 = vector.load %arg11[%c0_73, %c0_74, %c0_75] : memref<2x1x256xf32, #tpu.memory_space<vmem>>, vector<1x1x256xf32>
    %114 = vector.shape_cast %113 : vector<1x1x256xf32> to vector<1x256xf32>
    %115 = vector.shape_cast %112 : vector<1x256xf32> to vector<1x1x256xf32>
    tpu.vector_store %arg11[%c0_73, %c0_74, %c0_75], %115 {strides = array<i32>} : memref<2x1x256xf32, #tpu.memory_space<vmem>>, vector<1x1x256xf32>,
    %116 = vector.shape_cast %112 : vector<1x256xf32> to vector<1x1x256xf32>
    %cst_76 = arith.constant dense<0.000000e+00> : vector<1xf32>
    %117 = vector.multi_reduction <add>, %116, %cst_76 [1, 2] : vector<1x1x256xf32> to vector<1xf32>
    %118 = vector.shape_cast %117 : vector<1xf32> to vector<1x1x1xf32>
    %119 = vector.extract %118[0, 0, 0] : f32 from vector<1x1x1xf32>
    %120 = vector.broadcast %119 : f32 to vector<1x1xf32>
    %121 = arith.addf %93, %120 : vector<1x1xf32>
    %122 = arith.mulf %112, %112 : vector<1x256xf32>
    %123 = vector.shape_cast %122 : vector<1x256xf32> to vector<1x1x256xf32>
    %cst_77 = arith.constant dense<0.000000e+00> : vector<1xf32>
    %124 = vector.multi_reduction <add>, %123, %cst_77 [1, 2] : vector<1x1x256xf32> to vector<1xf32>
    %125 = vector.shape_cast %124 : vector<1xf32> to vector<1x1x1xf32>
    %126 = vector.extract %125[0, 0, 0] : f32 from vector<1x1x1xf32>
    %127 = vector.broadcast %126 : f32 to vector<1x1xf32>
    %128 = arith.addf %94, %127 : vector<1x1xf32>
    %c1_78 = arith.constant 1 : index
    %c0_79 = arith.constant 0 : index
    %c0_80 = arith.constant 0 : index
    %129 = vector.load %arg9[%c1_78, %c0_79, %c0_80] : memref<2x8x256xf32, #tpu.memory_space<vmem>>, vector<1x8x256xf32>
    %130 = vector.shape_cast %129 : vector<1x8x256xf32> to vector<8x256xf32>
    %131 = vector.broadcast %72 : vector<8x1xf32> to vector<8x256xf32>
    %132 = arith.mulf %131, %130 : vector<8x256xf32>
    %c1_81 = arith.constant 1 : index
    %c0_82 = arith.constant 0 : index
    %c0_83 = arith.constant 0 : index
    %133 = vector.load %arg10[%c1_81, %c0_82, %c0_83] : memref<2x8x256xf32, #tpu.memory_space<vmem>>, vector<1x8x256xf32>
    %134 = vector.shape_cast %133 : vector<1x8x256xf32> to vector<8x256xf32>
    %135 = vector.broadcast %88 : vector<8x1xf32> to vector<8x256xf32>
    %136 = arith.mulf %135, %134 : vector<8x256xf32>
    %137 = arith.addf %132, %136 : vector<8x256xf32>
    %138 = vector.broadcast %92 : vector<8x1xf32> to vector<8x256xf32>
    %139 = arith.addf %137, %138 : vector<8x256xf32>
    %cst_84 = arith.constant 0.000000e+00 : f32
    %140 = vector.broadcast %cst_84 : f32 to vector<8x256xf32>
    %141 = arith.maximumf %139, %140 : vector<8x256xf32>
    %c0_85 = arith.constant 0 : index
    %c0_86 = arith.constant 0 : index
    %142 = vector.load %arg4[%c0_85, %c0_86] : memref<8x1xf32, #tpu.memory_space<vmem>>, vector<8x1xf32>
    %143 = vector.broadcast %142 : vector<8x1xf32> to vector<8x256xf32>
    %144 = arith.mulf %143, %141 : vector<8x256xf32>
    %cst_87 = arith.constant dense<0.000000e+00> : vector<256xf32>
    %145 = vector.multi_reduction <add>, %144, %cst_87 [0] : vector<8x256xf32> to vector<256xf32>
    %146 = vector.shape_cast %145 : vector<256xf32> to vector<1x256xf32>
    %c1_88 = arith.constant 1 : index
    %c0_89 = arith.constant 0 : index
    %c0_90 = arith.constant 0 : index
    %147 = vector.load %arg11[%c1_88, %c0_89, %c0_90] : memref<2x1x256xf32, #tpu.memory_space<vmem>>, vector<1x1x256xf32>
    %148 = vector.shape_cast %147 : vector<1x1x256xf32> to vector<1x256xf32>
    %149 = vector.shape_cast %146 : vector<1x256xf32> to vector<1x1x256xf32>
    tpu.vector_store %arg11[%c1_88, %c0_89, %c0_90], %149 {strides = array<i32>} : memref<2x1x256xf32, #tpu.memory_space<vmem>>, vector<1x1x256xf32>,
    %150 = vector.shape_cast %146 : vector<1x256xf32> to vector<1x1x256xf32>
    %cst_91 = arith.constant dense<0.000000e+00> : vector<1xf32>
    %151 = vector.multi_reduction <add>, %150, %cst_91 [1, 2] : vector<1x1x256xf32> to vector<1xf32>
    %152 = vector.shape_cast %151 : vector<1xf32> to vector<1x1x1xf32>
    %153 = vector.extract %152[0, 0, 0] : f32 from vector<1x1x1xf32>
    %154 = vector.broadcast %153 : f32 to vector<1x1xf32>
    %155 = arith.addf %121, %154 : vector<1x1xf32>
    %156 = arith.mulf %146, %146 : vector<1x256xf32>
    %157 = vector.shape_cast %156 : vector<1x256xf32> to vector<1x1x256xf32>
    %cst_92 = arith.constant dense<0.000000e+00> : vector<1xf32>
    %158 = vector.multi_reduction <add>, %157, %cst_92 [1, 2] : vector<1x1x256xf32> to vector<1xf32>
    %159 = vector.shape_cast %158 : vector<1xf32> to vector<1x1x1xf32>
    %160 = vector.extract %159[0, 0, 0] : f32 from vector<1x1x1xf32>
    %161 = vector.broadcast %160 : f32 to vector<1x1xf32>
    %162 = arith.addf %128, %161 : vector<1x1xf32>
    %cst_93 = arith.constant 0.001953125 : f32
    %163 = vector.broadcast %cst_93 : f32 to vector<1x1xf32>
    %164 = arith.mulf %155, %163 : vector<1x1xf32>
    %cst_94 = arith.constant 0.001953125 : f32
    %165 = vector.broadcast %cst_94 : f32 to vector<1x1xf32>
    %166 = arith.mulf %162, %165 : vector<1x1xf32>
    %167 = arith.mulf %164, %164 : vector<1x1xf32>
    %168 = arith.subf %166, %167 : vector<1x1xf32>
    %cst_95 = arith.constant 0.000000e+00 : f32
    %169 = vector.broadcast %cst_95 : f32 to vector<1x1xf32>
    %170 = arith.maximumf %168, %169 : vector<1x1xf32>
    %c0_96 = arith.constant 0 : index
    %c0_97 = arith.constant 0 : index
    %171 = vector.load %arg7[%c0_96, %c0_97] : memref<1x2xf32, #tpu.memory_space<vmem>>, vector<1x1xf32>
    %cst_98 = arith.constant 9.99999974E-6 : f32
    %172 = vector.broadcast %cst_98 : f32 to vector<1x1xf32>
    %173 = arith.addf %170, %172 : vector<1x1xf32>
    %174 = math.rsqrt %173 : vector<1x1xf32>
    %175 = arith.mulf %171, %174 : vector<1x1xf32>
    %c0_99 = arith.constant 0 : index
    %c1_100 = arith.constant 1 : index
    %176 = vector.load %arg7[%c0_99, %c1_100] : memref<1x2xf32, #tpu.memory_space<vmem>>, vector<1x1xf32>
    %177 = arith.mulf %164, %175 : vector<1x1xf32>
    %178 = arith.subf %176, %177 : vector<1x1xf32>
    %c0_101 = arith.constant 0 : index
    %c0_102 = arith.constant 0 : index
    %c0_103 = arith.constant 0 : index
    %179 = vector.load %arg11[%c0_101, %c0_102, %c0_103] : memref<2x1x256xf32, #tpu.memory_space<vmem>>, vector<1x1x256xf32>
    %180 = vector.shape_cast %179 : vector<1x1x256xf32> to vector<1x256xf32>
    %181 = vector.broadcast %175 : vector<1x1xf32> to vector<1x256xf32>
    %182 = arith.mulf %180, %181 : vector<1x256xf32>
    %183 = vector.broadcast %178 : vector<1x1xf32> to vector<1x256xf32>
    %184 = arith.addf %182, %183 : vector<1x256xf32>
    %185 = arith.negf %184 : vector<1x256xf32>
    %186 = math.exp %185 : vector<1x256xf32>
    %cst_104 = arith.constant 1.000000e+00 : f32
    %187 = vector.broadcast %cst_104 : f32 to vector<1x256xf32>
    %188 = arith.addf %187, %186 : vector<1x256xf32>
    %189 = arith.divf %187, %188 : vector<1x256xf32>
    %c0_105 = arith.constant 0 : index
    %c0_106 = arith.constant 0 : index
    %c0_107 = arith.constant 0 : index
    %190 = vector.load %arg1[%c0_105, %c0_106, %c0_107] : memref<2x4x256xf32, #tpu.memory_space<vmem>>, vector<1x4x256xf32>
    %191 = vector.shape_cast %190 : vector<1x4x256xf32> to vector<4x256xf32>
    %192 = vector.broadcast %189 : vector<1x256xf32> to vector<4x256xf32>
    %193 = arith.mulf %191, %192 : vector<4x256xf32>
    %c0_108 = arith.constant 0 : index
    %c0_109 = arith.constant 0 : index
    %c0_110 = arith.constant 0 : index
    %194 = vector.load %arg8[%c0_108, %c0_109, %c0_110] : memref<2x4x256xf32, #tpu.memory_space<vmem>>, vector<1x4x256xf32>
    %195 = vector.shape_cast %194 : vector<1x4x256xf32> to vector<4x256xf32>
    %196 = vector.shape_cast %193 : vector<4x256xf32> to vector<1x4x256xf32>
    tpu.vector_store %arg8[%c0_108, %c0_109, %c0_110], %196 {strides = array<i32>} : memref<2x4x256xf32, #tpu.memory_space<vmem>>, vector<1x4x256xf32>,
    %c1_111 = arith.constant 1 : index
    %c0_112 = arith.constant 0 : index
    %c0_113 = arith.constant 0 : index
    %197 = vector.load %arg11[%c1_111, %c0_112, %c0_113] : memref<2x1x256xf32, #tpu.memory_space<vmem>>, vector<1x1x256xf32>
    %198 = vector.shape_cast %197 : vector<1x1x256xf32> to vector<1x256xf32>
    %199 = vector.broadcast %175 : vector<1x1xf32> to vector<1x256xf32>
    %200 = arith.mulf %198, %199 : vector<1x256xf32>
    %201 = vector.broadcast %178 : vector<1x1xf32> to vector<1x256xf32>
    %202 = arith.addf %200, %201 : vector<1x256xf32>
    %203 = arith.negf %202 : vector<1x256xf32>
    %204 = math.exp %203 : vector<1x256xf32>
    %cst_114 = arith.constant 1.000000e+00 : f32
    %205 = vector.broadcast %cst_114 : f32 to vector<1x256xf32>
    %206 = arith.addf %205, %204 : vector<1x256xf32>
    %207 = arith.divf %205, %206 : vector<1x256xf32>
    %c1_115 = arith.constant 1 : index
    %c0_116 = arith.constant 0 : index
    %c0_117 = arith.constant 0 : index
    %208 = vector.load %arg1[%c1_115, %c0_116, %c0_117] : memref<2x4x256xf32, #tpu.memory_space<vmem>>, vector<1x4x256xf32>
    %209 = vector.shape_cast %208 : vector<1x4x256xf32> to vector<4x256xf32>
    %210 = vector.broadcast %207 : vector<1x256xf32> to vector<4x256xf32>
    %211 = arith.mulf %209, %210 : vector<4x256xf32>
    %c1_118 = arith.constant 1 : index
    %c0_119 = arith.constant 0 : index
    %c0_120 = arith.constant 0 : index
    %212 = vector.load %arg8[%c1_118, %c0_119, %c0_120] : memref<2x4x256xf32, #tpu.memory_space<vmem>>, vector<1x4x256xf32>
    %213 = vector.shape_cast %212 : vector<1x4x256xf32> to vector<4x256xf32>
    %214 = vector.shape_cast %211 : vector<4x256xf32> to vector<1x4x256xf32>
    tpu.vector_store %arg8[%c1_118, %c0_119, %c0_120], %214 {strides = array<i32>} : memref<2x4x256xf32, #tpu.memory_space<vmem>>, vector<1x4x256xf32>,
    return
  }
}

</mosaic_0001>

<llo_original>
// kernel: attention_block.1
$region0: #{attention_block.1}
  #allocation0 [shape = 'u32[]', space=smem, size = 0x4, offset = 0x4, fixed_abs, tag = 'smem constant byte address 0x4 - core index']
  #allocation1 [shape = 'u32[72,128]{1,0:T(1,128)}', space=vmem, size = 0x9000, scoped, tag = 'internal scratch']
  #allocation2 [shape = 'f32[2,8,256]{2,1,0:T(8,128)}', space=vmem, size = 0x4000, scoped, tag = 'scratch operand']
  #allocation3 [shape = 'f32[2,8,256]{2,1,0:T(8,128)}', space=vmem, size = 0x4000, scoped, tag = 'scratch operand']
  #allocation4 [shape = 'f32[2,1,256]{2,1,0:T(1,128)}', space=vmem, size = 0x800, scoped, tag = 'scratch operand']
  %s0 = inlined_call_operand.vmem [shape: f32[2,4,256], index: 0, kind: input, shape index: {}]
  %s1 = inlined_call_operand.vmem [shape: f32[2,4,256], index: 1, kind: input, shape index: {}]
  %s2 = inlined_call_operand.vmem [shape: f32[8,4], index: 2, kind: input, shape index: {}]
  %s3 = inlined_call_operand.vmem [shape: f32[8,4], index: 3, kind: input, shape index: {}]
  %s4 = inlined_call_operand.vmem [shape: f32[8,1], index: 4, kind: input, shape index: {}]
  %s5 = inlined_call_operand.vmem [shape: f32[8,2], index: 5, kind: input, shape index: {}]
  %s6 = inlined_call_operand.vmem [shape: f32[8,2], index: 6, kind: input, shape index: {}]
  %s7 = inlined_call_operand.vmem [shape: f32[1,2], index: 7, kind: input, shape index: {}]
  %s8 = inlined_call_operand.vmem [shape: f32[2,4,256], index: 8, kind: output, shape index: {}]
  %s9 = sld [smem:[#allocation0]]
  $region42: #{attention_block.1} parent=0
    _
  %s11 = ssub.s32 1, %s9
  %s12 = scalar_select 0, %s11, %s9
  // Predicated region
  $region2: #{attention_block.1} parent=0 // pred_check
    _
  $region3: #{attention_block.1} parent=0 // pred_check_branch
    %14 = sbr.rel (0) target = $region5
  $region4: #{attention_block.1} parent=0 // pred_region
    _
  $region5: #{attention_block.1} parent=0 // pred_fallthru
    _
  // Predicated region
  $region6: #{attention_block.1} parent=0 // pred_check
    _
  $region7: #{attention_block.1} parent=0 // pred_check_branch
    %16 = sbr.rel (0) target = $region9
  $region8: #{attention_block.1} parent=0 // pred_region
    _
  $region9: #{attention_block.1} parent=0 // pred_fallthru
    _
  // Predicated region
  $region10: #{attention_block.1} parent=0 // pred_check
    _
  $region11: #{attention_block.1} parent=0 // pred_check_branch
    %18 = sbr.rel (0) target = $region13
  $region12: #{attention_block.1} parent=0 // pred_region
    _
  $region13: #{attention_block.1} parent=0 // pred_fallthru
    _
  // Predicated region
  $region14: #{attention_block.1} parent=0 // pred_check
    _
  $region15: #{attention_block.1} parent=0 // pred_check_branch
    %20 = sbr.rel (0) target = $region17
  $region16: #{attention_block.1} parent=0 // pred_region
    _
  $region17: #{attention_block.1} parent=0 // pred_fallthru
    _
  // Predicated region
  $region18: #{attention_block.1} parent=0 // pred_check
    _
  $region19: #{attention_block.1} parent=0 // pred_check_branch
    %22 = sbr.rel (0) target = $region21
  $region20: #{attention_block.1} parent=0 // pred_region
    _
  $region21: #{attention_block.1} parent=0 // pred_fallthru
    _
  // Predicated region
  $region22: #{attention_block.1} parent=0 // pred_check
    _
  $region23: #{attention_block.1} parent=0 // pred_check_branch
    %24 = sbr.rel (0) target = $region25
  $region24: #{attention_block.1} parent=0 // pred_region
    _
  $region25: #{attention_block.1} parent=0 // pred_fallthru
    _
  // Predicated region
  $region26: #{attention_block.1} parent=0 // pred_check
    _
  $region27: #{attention_block.1} parent=0 // pred_check_branch
    %26 = sbr.rel (0) target = $region29
  $region28: #{attention_block.1} parent=0 // pred_region
    _
  $region29: #{attention_block.1} parent=0 // pred_fallthru
    _
  // Predicated region
  $region30: #{attention_block.1} parent=0 // pred_check
    _
  $region31: #{attention_block.1} parent=0 // pred_check_branch
    %28 = sbr.rel (0) target = $region33
  $region32: #{attention_block.1} parent=0 // pred_region
    _
  $region33: #{attention_block.1} parent=0 // pred_fallthru
    _
  %v29 = vld [vmem:[%s2] sm:$0xff]
  %v30 = vld [vmem:[%s0] sm:$0xff]
  %32 = vst [vmem:[#allocation1] ss:$2 sm:$0xff] %v30
  %v33 = vld.sshfl [vmem:[#allocation1] sm:$0xff pattern:$0x75316420]
  %v34 = vld.sshfl [vmem:[#allocation1 + $0x8] sm:$0xff pattern:$0x75316420]
  %vm35 = vcmask 31744
  %v37 = vsel %vm35, %v29, 0
  %vm39 = vcmask 1043456
  %v40 = vsel %vm39, %v33, 0
  %v42 = vsel %vm39, %v34, 0
  %44 = vmatpush.msra.mxu0 0.0
  %45 = vmatpush.msra.mxu0 0.0
  %46 = vmatpush.msra.mxu0 0.0
  %47 = vmatpush.msra.mxu0 0.0
  %48 = vmatpush.msra.mxu0 0.0
  %49 = vmatpush.msra.mxu0 0.0
  %50 = vmatpush.msra.mxu0 0.0
  %51 = vmatpush.msra.mxu0 0.0
  %52 = vmatpush.msra.mxu0 0.0
  %53 = vmatpush.msra.mxu0 0.0
  %54 = vmatpush.msra.mxu0 0.0
  %55 = vmatpush.msra.mxu0 0.0
  %56 = vmatpush.msra.mxu0 0.0
  %57 = vmatpush.msra.mxu0 0.0
  %58 = vmatpush.msra.mxu0 0.0
  %59 = vmatpush.msra.mxu0 %v40
  %60 = vmatmul.f32.gmra.mxu0 %v37
  %v61 = vpop.f32.mrf.mxu0
  %v62 = vadd.f32 0.0, %v61
  %63 = vdwg.mxu0
  %64 = vmatpush.msra.mxu0 0.0
  %65 = vmatpush.msra.mxu0 0.0
  %66 = vmatpush.msra.mxu0 0.0
  %67 = vmatpush.msra.mxu0 0.0
  %68 = vmatpush.msra.mxu0 0.0
  %69 = vmatpush.msra.mxu0 0.0
  %70 = vmatpush.msra.mxu0 0.0
  %71 = vmatpush.msra.mxu0 0.0
  %72 = vmatpush.msra.mxu0 0.0
  %73 = vmatpush.msra.mxu0 0.0
  %74 = vmatpush.msra.mxu0 0.0
  %75 = vmatpush.msra.mxu0 0.0
  %76 = vmatpush.msra.mxu0 0.0
  %77 = vmatpush.msra.mxu0 0.0
  %78 = vmatpush.msra.mxu0 0.0
  %79 = vmatpush.msra.mxu0 %v42
  %80 = vmatmul.f32.gmra.mxu0 %v37
  %v81 = vpop.f32.mrf.mxu0
  %v82 = vadd.f32 0.0, %v81
  %83 = vdwg.mxu0
  %v84 = vld [vmem:[%s3] sm:$0xff]
  %v85 = vld [vmem:[%s1] sm:$0xff]
  %87 = vst [vmem:[#allocation1] ss:$2 sm:$0xff] %v85
  %v88 = vld.sshfl [vmem:[#allocation1] sm:$0xff pattern:$0x75316420]
  %v89 = vld.sshfl [vmem:[#allocation1 + $0x8] sm:$0xff pattern:$0x75316420]
  %v91 = vsel %vm35, %v84, 0
  %v93 = vsel %vm39, %v88, 0
  %v95 = vsel %vm39, %v89, 0
  %97 = vmatpush.msra.mxu0 0.0
  %98 = vmatpush.msra.mxu0 0.0
  %99 = vmatpush.msra.mxu0 0.0
  %100 = vmatpush.msra.mxu0 0.0
  %101 = vmatpush.msra.mxu0 0.0
  %102 = vmatpush.msra.mxu0 0.0
  %103 = vmatpush.msra.mxu0 0.0
  %104 = vmatpush.msra.mxu0 0.0
  %105 = vmatpush.msra.mxu0 0.0
  %106 = vmatpush.msra.mxu0 0.0
  %107 = vmatpush.msra.mxu0 0.0
  %108 = vmatpush.msra.mxu0 0.0
  %109 = vmatpush.msra.mxu0 0.0
  %110 = vmatpush.msra.mxu0 0.0
  %111 = vmatpush.msra.mxu0 0.0
  %112 = vmatpush.msra.mxu0 %v93
  %113 = vmatmul.f32.gmra.mxu0 %v91
  %v114 = vpop.f32.mrf.mxu0
  %v115 = vadd.f32 0.0, %v114
  %116 = vdwg.mxu0
  %117 = vmatpush.msra.mxu0 0.0
  %118 = vmatpush.msra.mxu0 0.0
  %119 = vmatpush.msra.mxu0 0.0
  %120 = vmatpush.msra.mxu0 0.0
  %121 = vmatpush.msra.mxu0 0.0
  %122 = vmatpush.msra.mxu0 0.0
  %123 = vmatpush.msra.mxu0 0.0
  %124 = vmatpush.msra.mxu0 0.0
  %125 = vmatpush.msra.mxu0 0.0
  %126 = vmatpush.msra.mxu0 0.0
  %127 = vmatpush.msra.mxu0 0.0
  %128 = vmatpush.msra.mxu0 0.0
  %129 = vmatpush.msra.mxu0 0.0
  %130 = vmatpush.msra.mxu0 0.0
  %131 = vmatpush.msra.mxu0 0.0
  %132 = vmatpush.msra.mxu0 %v95
  %133 = vmatmul.f32.gmra.mxu0 %v91
  %v134 = vpop.f32.mrf.mxu0
  %v135 = vadd.f32 0.0, %v134
  %136 = vdwg.mxu0
  %137 = vst [vmem:[#allocation2] sm:$0xff] %v62
  %138 = vst [vmem:[#allocation2 + $0x8] sm:$0xff] %v82
  %139 = vst [vmem:[#allocation3] sm:$0xff] %v115
  %140 = vst [vmem:[#allocation3 + $0x8] sm:$0xff] %v135
  %v141 = vadd.f32 %v62, %v82
  %142 = vadd.xlane.f32.xlu0 %v141
  %v143 = vpop.xlane.xlu0 %142
  %v144 = vadd.f32 %v143, 0.0
  %v145 = vmul.f32 %v62, %v62
  %v146 = vmul.f32 %v82, %v82
  %v147 = vadd.f32 %v145, %v146
  %148 = vadd.xlane.f32.xlu0 %v147
  %v149 = vpop.xlane.xlu0 %148
  %v150 = vadd.f32 %v149, 0.0
  %v151 = vadd.f32 %v115, %v135
  %152 = vadd.xlane.f32.xlu0 %v151
  %v153 = vpop.xlane.xlu0 %152
  %v154 = vadd.f32 %v153, 0.0
  %v155 = vmul.f32 %v115, %v115
  %v156 = vmul.f32 %v135, %v135
  %v157 = vadd.f32 %v155, %v156
  %158 = vadd.xlane.f32.xlu0 %v157
  %v159 = vpop.xlane.xlu0 %158
  %v160 = vadd.f32 %v159, 0.0
  %v161 = vld [vmem:[%s2] sm:$0xff]
  %s162 = scalar_lea.vmem %s0, 8
  %v163 = vld [vmem:[%s162] sm:$0xff]
  %165 = vst [vmem:[#allocation1] ss:$2 sm:$0xff] %v163
  %v166 = vld.sshfl [vmem:[#allocation1] sm:$0xff pattern:$0x75316420]
  %v167 = vld.sshfl [vmem:[#allocation1 + $0x8] sm:$0xff pattern:$0x75316420]
  %v169 = vsel %vm35, %v161, 0
  %v171 = vsel %vm39, %v166, 0
  %v173 = vsel %vm39, %v167, 0
  %175 = vmatpush.msra.mxu0 0.0
  %176 = vmatpush.msra.mxu0 0.0
  %177 = vmatpush.msra.mxu0 0.0
  %178 = vmatpush.msra.mxu0 0.0
  %179 = vmatpush.msra.mxu0 0.0
  %180 = vmatpush.msra.mxu0 0.0
  %181 = vmatpush.msra.mxu0 0.0
  %182 = vmatpush.msra.mxu0 0.0
  %183 = vmatpush.msra.mxu0 0.0
  %184 = vmatpush.msra.mxu0 0.0
  %185 = vmatpush.msra.mxu0 0.0
  %186 = vmatpush.msra.mxu0 0.0
  %187 = vmatpush.msra.mxu0 0.0
  %188 = vmatpush.msra.mxu0 0.0
  %189 = vmatpush.msra.mxu0 0.0
  %190 = vmatpush.msra.mxu0 %v171
  %191 = vmatmul.f32.gmra.mxu0 %v169
  %v192 = vpop.f32.mrf.mxu0
  %v193 = vadd.f32 0.0, %v192
  %194 = vdwg.mxu0
  %195 = vmatpush.msra.mxu0 0.0
  %196 = vmatpush.msra.mxu0 0.0
  %197 = vmatpush.msra.mxu0 0.0
  %198 = vmatpush.msra.mxu0 0.0
  %199 = vmatpush.msra.mxu0 0.0
  %200 = vmatpush.msra.mxu0 0.0
  %201 = vmatpush.msra.mxu0 0.0
  %202 = vmatpush.msra.mxu0 0.0
  %203 = vmatpush.msra.mxu0 0.0
  %204 = vmatpush.msra.mxu0 0.0
  %205 = vmatpush.msra.mxu0 0.0
  %206 = vmatpush.msra.mxu0 0.0
  %207 = vmatpush.msra.mxu0 0.0
  %208 = vmatpush.msra.mxu0 0.0
  %209 = vmatpush.msra.mxu0 0.0
  %210 = vmatpush.msra.mxu0 %v173
  %211 = vmatmul.f32.gmra.mxu0 %v169
  %v212 = vpop.f32.mrf.mxu0
  %v213 = vadd.f32 0.0, %v212
  %214 = vdwg.mxu0
  %v215 = vld [vmem:[%s3] sm:$0xff]
  %s216 = scalar_lea.vmem %s1, 8
  %v217 = vld [vmem:[%s216] sm:$0xff]
  %219 = vst [vmem:[#allocation1] ss:$2 sm:$0xff] %v217
  %v220 = vld.sshfl [vmem:[#allocation1] sm:$0xff pattern:$0x75316420]
  %v221 = vld.sshfl [vmem:[#allocation1 + $0x8] sm:$0xff pattern:$0x75316420]
  %v223 = vsel %vm35, %v215, 0
  %v225 = vsel %vm39, %v220, 0
  %v227 = vsel %vm39, %v221, 0
  %229 = vmatpush.msra.mxu0 0.0
  %230 = vmatpush.msra.mxu0 0.0
  %231 = vmatpush.msra.mxu0 0.0
  %232 = vmatpush.msra.mxu0 0.0
  %233 = vmatpush.msra.mxu0 0.0
  %234 = vmatpush.msra.mxu0 0.0
  %235 = vmatpush.msra.mxu0 0.0
  %236 = vmatpush.msra.mxu0 0.0
  %237 = vmatpush.msra.mxu0 0.0
  %238 = vmatpush.msra.mxu0 0.0
  %239 = vmatpush.msra.mxu0 0.0
  %240 = vmatpush.msra.mxu0 0.0
  %241 = vmatpush.msra.mxu0 0.0
  %242 = vmatpush.msra.mxu0 0.0
  %243 = vmatpush.msra.mxu0 0.0
  %244 = vmatpush.msra.mxu0 %v225
  %245 = vmatmul.f32.gmra.mxu0 %v223
  %v246 = vpop.f32.mrf.mxu0
  %v247 = vadd.f32 0.0, %v246
  %248 = vdwg.mxu0
  %249 = vmatpush.msra.mxu0 0.0
  %250 = vmatpush.msra.mxu0 0.0
  %251 = vmatpush.msra.mxu0 0.0
  %252 = vmatpush.msra.mxu0 0.0
  %253 = vmatpush.msra.mxu0 0.0
  %254 = vmatpush.msra.mxu0 0.0
  %255 = vmatpush.msra.mxu0 0.0
  %256 = vmatpush.msra.mxu0 0.0
  %257 = vmatpush.msra.mxu0 0.0
  %258 = vmatpush.msra.mxu0 0.0
  %259 = vmatpush.msra.mxu0 0.0
  %260 = vmatpush.msra.mxu0 0.0
  %261 = vmatpush.msra.mxu0 0.0
  %262 = vmatpush.msra.mxu0 0.0
  %263 = vmatpush.msra.mxu0 0.0
  %264 = vmatpush.msra.mxu0 %v227
  %265 = vmatmul.f32.gmra.mxu0 %v223
  %v266 = vpop.f32.mrf.mxu0
  %v267 = vadd.f32 0.0, %v266
  %268 = vdwg.mxu0
  %s269 = scalar_lea.vmem [#allocation2], 16
  %270 = vst [vmem:[%s269] sm:$0xff] %v193
  %271 = vst [vmem:[%s269 + $0x8] sm:$0xff] %v213
  %s272 = scalar_lea.vmem [#allocation3], 16
  %273 = vst [vmem:[%s272] sm:$0xff] %v247
  %274 = vst [vmem:[%s272 + $0x8] sm:$0xff] %v267
  %v275 = vadd.f32 %v193, %v213
  %276 = vadd.xlane.f32.xlu0 %v275
  %v277 = vpop.xlane.xlu0 %276
  %v278 = vadd.f32 %v144, %v277
  %v279 = vmul.f32 %v193, %v193
  %v280 = vmul.f32 %v213, %v213
  %v281 = vadd.f32 %v279, %v280
  %282 = vadd.xlane.f32.xlu0 %v281
  %v283 = vpop.xlane.xlu0 %282
  %v284 = vadd.f32 %v150, %v283
  %v285 = vadd.f32 %v247, %v267
  %286 = vadd.xlane.f32.xlu0 %v285
  %v287 = vpop.xlane.xlu0 %286
  %v288 = vadd.f32 %v154, %v287
  %v289 = vmul.f32 %v247, %v247
  %v290 = vmul.f32 %v267, %v267
  %v291 = vadd.f32 %v289, %v290
  %292 = vadd.xlane.f32.xlu0 %v291
  %v293 = vpop.xlane.xlu0 %292
  %v294 = vadd.f32 %v160, %v293
  %v295 = vmul.f32 %v278, 0.001953125
  %v296 = vmul.f32 %v284, 0.001953125
  %v297 = vmul.f32 %v295, %v295
  %v298 = vsub.f32 %v296, %v297
  %v299 = vmax.f32 %v298, 0.0
  %v300 = vld [vmem:[%s5] sm:$0xff]
  %v301 = vadd.f32 %v299, 1e-05
  %v302 = vrsqrt.pop %v301
  %v303 = vmul.f32 %v302, %v301
  %v304 = vmul.f32 %v303, %v302
  %v305 = vmul.f32 0.5, %v304
  %v306 = vsub.f32 1.5, %v305
  %v307 = vmul.f32 %v302, %v306
  %vm308 = vweird.f32 %v301
  %vm309 = vweird.f32 %v302
  %vm310 = vmor %vm308, %vm309
  %v311 = vsel %vm310, %v302, %v307
  %v312 = vmul.f32 %v300, %v311
  %v313 = vmul.f32 %v295, %v312
  %315 = vrot.lane.b32.xlu0 %v313, 1
  %v316 = vpop.permute.xlu0 %315
  %v318 = vsub.f32 %v300, %v316
  %v319 = vmul.f32 %v288, 0.001953125
  %v320 = vmul.f32 %v294, 0.001953125
  %v321 = vmul.f32 %v319, %v319
  %v322 = vsub.f32 %v320, %v321
  %v323 = vmax.f32 %v322, 0.0
  %v324 = vld [vmem:[%s6] sm:$0xff]
  %v325 = vadd.f32 %v323, 1e-05
  %v326 = vrsqrt.pop %v325
  %v327 = vmul.f32 %v326, %v325
  %v328 = vmul.f32 %v327, %v326
  %v329 = vmul.f32 0.5, %v328
  %v330 = vsub.f32 1.5, %v329
  %v331 = vmul.f32 %v326, %v330
  %vm332 = vweird.f32 %v325
  %vm333 = vweird.f32 %v326
  %vm334 = vmor %vm332, %vm333
  %v335 = vsel %vm334, %v326, %v331
  %v336 = vmul.f32 %v324, %v335
  %v337 = vmul.f32 %v319, %v336
  %339 = vrot.lane.b32.xlu0 %v337, 1
  %v340 = vpop.permute.xlu0 %339
  %v342 = vsub.f32 %v324, %v340
  %v343 = vadd.f32 %v318, %v342
  %v344 = vld [vmem:[#allocation2] sm:$0xff]
  %v345 = vld [vmem:[#allocation2 + $0x8] sm:$0xff]
  %347 = vset.pattern.permute.xlu0 0
  %348 = vperm.xlu0 %347, %v312
  %v349 = vpop.permute.xlu0 %348
  %v351 = vmul.f32 %v349, %v344
  %v352 = vmul.f32 %v349, %v345
  %v353 = vld [vmem:[#allocation3] sm:$0xff]
  %v354 = vld [vmem:[#allocation3 + $0x8] sm:$0xff]
  %356 = vset.pattern.permute.xlu0 0
  %357 = vperm.xlu0 %356, %v336
  %v358 = vpop.permute.xlu0 %357
  %v360 = vmul.f32 %v358, %v353
  %v361 = vmul.f32 %v358, %v354
  %v362 = vadd.f32 %v351, %v360
  %v363 = vadd.f32 %v352, %v361
  %365 = vset.pattern.permute.xlu0 1
  %366 = vperm.xlu0 %365, %v343
  %v367 = vpop.permute.xlu0 %366
  %v369 = vadd.f32 %v362, %v367
  %v370 = vadd.f32 %v363, %v367
  %v371 = vmax.f32 %v369, 0.0
  %v372 = vmax.f32 %v370, 0.0
  %v373 = vld [vmem:[%s4] sm:$0xff]
  %375 = vset.pattern.permute.xlu0 0
  %376 = vperm.xlu0 %375, %v373
  %v377 = vpop.permute.xlu0 %376
  %v379 = vmul.f32 %v377, %v371
  %v380 = vmul.f32 %v377, %v372
  %v381 = vrot.slane %v379, 4
  %v382 = vadd.f32 %v379, %v381
  %v383 = vrot.slane %v382, 2
  %v384 = vadd.f32 %v382, %v383
  %v385 = vrot.slane %v384, 1
  %v386 = vadd.f32 %v384, %v385
  %v387 = vrot.slane %v380, 4
  %v388 = vadd.f32 %v380, %v387
  %v389 = vrot.slane %v388, 2
  %v390 = vadd.f32 %v388, %v389
  %v391 = vrot.slane %v390, 1
  %v392 = vadd.f32 %v390, %v391
  %v395 = vrot.slane %v392, 7
  %vm396 = vcmask 1040384
  %v397 = vsel %vm396, %v386, %v395
  %v399 = vlaneseq
  %vm400 = vcmp.ge.s32.totalorder %v399, 0
  %vm401 = vcmp.lt.s32.totalorder %v399, 256
  %vm402 = vmand %vm400, %vm401
  %403 = vst.msk [vmem:[#allocation4] sm:$0x3] %vm402, %v397
  %v404 = vsel %vm396, %v386, 0.0
  %v405 = vsel %vm396, %v392, 0.0
  %v406 = vadd.f32 %v404, %v405
  %407 = vadd.xlane.f32.xlu0 %v406
  %v408 = vpop.xlane.xlu0 %407
  %v409 = vrot.slane %v408, 4
  %v410 = vadd.f32 %v408, %v409
  %v411 = vrot.slane %v410, 2
  %v412 = vadd.f32 %v410, %v411
  %v413 = vrot.slane %v412, 1
  %v414 = vadd.f32 %v412, %v413
  %s415 = vtos %v414
  %v416 = vstv %s415
  %v417 = vadd.f32 %v416, 0.0
  %v418 = vmul.f32 %v386, %v386
  %v419 = vmul.f32 %v392, %v392
  %v420 = vsel %vm396, %v418, 0.0
  %v421 = vsel %vm396, %v419, 0.0
  %v422 = vadd.f32 %v420, %v421
  %423 = vadd.xlane.f32.xlu0 %v422
  %v424 = vpop.xlane.xlu0 %423
  %v425 = vrot.slane %v424, 4
  %v426 = vadd.f32 %v424, %v425
  %v427 = vrot.slane %v426, 2
  %v428 = vadd.f32 %v426, %v427
  %v429 = vrot.slane %v428, 1
  %v430 = vadd.f32 %v428, %v429
  %s431 = vtos %v430
  %v432 = vstv %s431
  %v433 = vadd.f32 %v432, 0.0
  %v434 = vld [vmem:[%s269] sm:$0xff]
  %v435 = vld [vmem:[%s269 + $0x8] sm:$0xff]
  %v436 = vmul.f32 %v349, %v434
  %v437 = vmul.f32 %v349, %v435
  %v438 = vld [vmem:[%s272] sm:$0xff]
  %v439 = vld [vmem:[%s272 + $0x8] sm:$0xff]
  %v440 = vmul.f32 %v358, %v438
  %v441 = vmul.f32 %v358, %v439
  %v442 = vadd.f32 %v436, %v440
  %v443 = vadd.f32 %v437, %v441
  %v444 = vadd.f32 %v442, %v367
  %v445 = vadd.f32 %v443, %v367
  %v446 = vmax.f32 %v444, 0.0
  %v447 = vmax.f32 %v445, 0.0
  %v448 = vld [vmem:[%s4] sm:$0xff]
  %450 = vset.pattern.permute.xlu0 0
  %451 = vperm.xlu0 %450, %v448
  %v452 = vpop.permute.xlu0 %451
  %v454 = vmul.f32 %v452, %v446
  %v455 = vmul.f32 %v452, %v447
  %v456 = vrot.slane %v454, 4
  %v457 = vadd.f32 %v454, %v456
  %v458 = vrot.slane %v457, 2
  %v459 = vadd.f32 %v457, %v458
  %v460 = vrot.slane %v459, 1
  %v461 = vadd.f32 %v459, %v460
  %v462 = vrot.slane %v455, 4
  %v463 = vadd.f32 %v455, %v462
  %v464 = vrot.slane %v463, 2
  %v465 = vadd.f32 %v463, %v464
  %v466 = vrot.slane %v465, 1
  %v467 = vadd.f32 %v465, %v466
  %v470 = vrot.slane %v467, 7
  %v471 = vsel %vm396, %v461, %v470
  %s473 = scalar_lea.vmem [#allocation4], 2
  %474 = vst.msk [vmem:[%s473] sm:$0x3] %vm402, %v471
  %v475 = vsel %vm396, %v461, 0.0
  %v476 = vsel %vm396, %v467, 0.0
  %v477 = vadd.f32 %v475, %v476
  %478 = vadd.xlane.f32.xlu0 %v477
  %v479 = vpop.xlane.xlu0 %478
  %v480 = vrot.slane %v479, 4
  %v481 = vadd.f32 %v479, %v480
  %v482 = vrot.slane %v481, 2
  %v483 = vadd.f32 %v481, %v482
  %v484 = vrot.slane %v483, 1
  %v485 = vadd.f32 %v483, %v484
  %s486 = vtos %v485
  %v487 = vstv %s486
  %v488 = vadd.f32 %v417, %v487
  %v489 = vmul.f32 %v461, %v461
  %v490 = vmul.f32 %v467, %v467
  %v491 = vsel %vm396, %v489, 0.0
  %v492 = vsel %vm396, %v490, 0.0
  %v493 = vadd.f32 %v491, %v492
  %494 = vadd.xlane.f32.xlu0 %v493
  %v495 = vpop.xlane.xlu0 %494
  %v496 = vrot.slane %v495, 4
  %v497 = vadd.f32 %v495, %v496
  %v498 = vrot.slane %v497, 2
  %v499 = vadd.f32 %v497, %v498
  %v500 = vrot.slane %v499, 1
  %v501 = vadd.f32 %v499, %v500
  %s502 = vtos %v501
  %v503 = vstv %s502
  %v504 = vadd.f32 %v433, %v503
  %v505 = vmul.f32 %v488, 0.001953125
  %v506 = vmul.f32 %v504, 0.001953125
  %v507 = vmul.f32 %v505, %v505
  %v508 = vsub.f32 %v506, %v507
  %v509 = vmax.f32 %v508, 0.0
  %v510 = vld [vmem:[%s7] sm:$0x1]
  %v511 = vadd.f32 %v509, 1e-05
  %v512 = vrsqrt.pop %v511
  %v513 = vmul.f32 %v512, %v511
  %v514 = vmul.f32 %v513, %v512
  %v515 = vmul.f32 0.5, %v514
  %v516 = vsub.f32 1.5, %v515
  %v517 = vmul.f32 %v512, %v516
  %vm518 = vweird.f32 %v511
  %vm519 = vweird.f32 %v512
  %vm520 = vmor %vm518, %vm519
  %v521 = vsel %vm520, %v512, %v517
  %v522 = vmul.f32 %v510, %v521
  %v523 = vmul.f32 %v505, %v522
  %525 = vrot.lane.b32.xlu0 %v523, 1
  %v526 = vpop.permute.xlu0 %525
  %v528 = vsub.f32 %v510, %v526
  %v529 = vld [vmem:[#allocation4] sm:$0x3]
  %531 = vset.pattern.permute.xlu0 0
  %532 = vperm.xlu0 %531, %v522
  %v533 = vpop.permute.xlu0 %532
  %v535 = vperm.slane %v533, 0
  %v536 = vmul.f32 %v529, %v535
  %538 = vset.pattern.permute.xlu0 1
  %539 = vperm.xlu0 %538, %v528
  %v540 = vpop.permute.xlu0 %539
  %v542 = vperm.slane %v540, 0
  %v543 = vadd.f32 %v536, %v542
  %v544 = vxor.u32 %v543, 2147483648
  %v545 = vmul.f32 %v544, 1.442695
  %v546 = vpow.pop %v545
  %v547 = vadd.f32 %v546, 1.0
  %v548 = vrcp.pop %v547
  %v549 = vmul.f32 %v547, %v548
  %v550 = vsub.f32 1.0, %v549
  %v551 = vmul.f32 %v548, %v550
  %v552 = vadd.f32 %v548, %v551
  %vm553 = vweird.f32 %v547
  %vm554 = vweird.f32 %v548
  %vm555 = vmor %vm553, %vm554
  %v556 = vsel %vm555, %v548, %v552
  %v557 = vand.u32 2147483647, %v547
  %vm558 = vcmp.eq.f32.partialorder %v557, 8.507059e+37
  %v559 = vand.u32 %v547, 2147483648
  %v560 = vor.u32 1.1754944e-38, %v559
  %v561 = vsel %vm558, %v560, %v556
  %v562 = vmul.f32 1.0, %v561
  %v563 = vld [vmem:[%s1] sm:$0xff]
  %v565 = vperm.slane %v562, 0
  %v566 = vperm.slane %v562, 1
  %v567 = vrot.slane %v566, 4
  %v568 = vsel %vm39, %v565, %v567
  %v570 = vmul.f32 %v563, %v568
  %571 = vst [vmem:[%s8] sm:$0xff] %v570
  %v572 = vld [vmem:[%s473] sm:$0x3]
  %v573 = vmul.f32 %v572, %v535
  %v574 = vadd.f32 %v573, %v542
  %v575 = vxor.u32 %v574, 2147483648
  %v576 = vmul.f32 %v575, 1.442695
  %v577 = vpow.pop %v576
  %v578 = vadd.f32 %v577, 1.0
  %v579 = vrcp.pop %v578
  %v580 = vmul.f32 %v578, %v579
  %v581 = vsub.f32 1.0, %v580
  %v582 = vmul.f32 %v579, %v581
  %v583 = vadd.f32 %v579, %v582
  %vm584 = vweird.f32 %v578
  %vm585 = vweird.f32 %v579
  %vm586 = vmor %vm584, %vm585
  %v587 = vsel %vm586, %v579, %v583
  %v588 = vand.u32 2147483647, %v578
  %vm589 = vcmp.eq.f32.partialorder %v588, 8.507059e+37
  %v590 = vand.u32 %v578, 2147483648
  %v591 = vor.u32 1.1754944e-38, %v590
  %v592 = vsel %vm589, %v591, %v587
  %v593 = vmul.f32 1.0, %v592
  %v594 = vld [vmem:[%s216] sm:$0xff]
  %v596 = vperm.slane %v593, 0
  %v597 = vperm.slane %v593, 1
  %v598 = vrot.slane %v597, 4
  %v599 = vsel %vm39, %v596, %v598
  %v601 = vmul.f32 %v594, %v599
  %s602 = scalar_lea.vmem %s8, 8
  %603 = vst [vmem:[%s602] sm:$0xff] %v601
  // Predicated region
  $region34: #{attention_block.1} parent=0 // pred_check
    _
  $region35: #{attention_block.1} parent=0 // pred_check_branch
    %605 = sbr.rel (0) target = $region37
  $region36: #{attention_block.1} parent=0 // pred_region
    _
  $region37: #{attention_block.1} parent=0 // pred_fallthru
    _
  // Predicated region
  $region38: #{attention_block.1} parent=0 // pred_check
    _
  $region39: #{attention_block.1} parent=0 // pred_check_branch
    %607 = sbr.rel (0) target = $region41
  $region40: #{attention_block.1} parent=0 // pred_region
    _
  $region41: #{attention_block.1} parent=0 // pred_fallthru
    _

</llo_original>
